<compile_context>
chip_gen: v5e
topology: v5e:2x2
jax: 0.10.0
libtpu: 0.0.40
codegen_flags: <defaults>
</compile_context>

<pallas_src>
import functools

import jax
import jax.numpy as jnp
from jax import lax
from jax.experimental import pallas as pl
from jax.experimental.pallas import tpu as pltpu

LANE = 128
SUBLANE = 8


def _round_up(v, m):
    return (v + m - 1) // m * m


# ----------------------------- fused Pallas kernel ------------------------------ #

def _generator_kernel(x_ref,
                      w0_ref, b0_ref,
                      w1_ref, b1_ref,
                      rw1_ref, rb1_ref, rw2_ref, rb2_ref,
                      w2_ref, b2_ref,
                      w3_ref, b3_ref,
                      o_ref, *, n_res):
    """Whole generator forward for one batch tile (BN folded into W/b, dropout = identity)."""
    # lin0 (+BN0 folded) + ReLU
    h = jnp.dot(x_ref[...], w0_ref[...], preferred_element_type=jnp.float32) + b0_ref[...]
    h = jnp.maximum(h, 0.0)
    # lin1 (+BN1 folded) + ReLU
    h = jnp.dot(h, w1_ref[...], preferred_element_type=jnp.float32) + b1_ref[...]
    h = jnp.maximum(h, 0.0)

    # Residual blocks over stacked weights.  Unrolled -> static indices into the stacked
    # refs (zero-cost views) and full scheduler visibility.
    def res_body(i, h):
        t = jnp.dot(h, rw1_ref[i], preferred_element_type=jnp.float32) + rb1_ref[i]
        t = jnp.maximum(t, 0.0)
        t = jnp.dot(t, rw2_ref[i], preferred_element_type=jnp.float32) + rb2_ref[i]
        return h + t

    h = lax.fori_loop(0, n_res, res_body, h, unroll=True)

    # lin2 (+BN2 folded) + ReLU
    h = jnp.dot(h, w2_ref[...], preferred_element_type=jnp.float32) + b2_ref[...]
    h = jnp.maximum(h, 0.0)
    # lin3 + tanh (no BN on the final layer)
    y = jnp.dot(h, w3_ref[...], preferred_element_type=jnp.float32) + b3_ref[...]
    o_ref[...] = jnp.tanh(y)


def _resident(a):
    """Full-array block whose index_map is constant -> fetched once, VMEM-resident."""
    return pl.BlockSpec(a.shape, lambda b: (0,) * a.ndim)


def generator_forward(x, pk):
    """x: (B, input_dim) f32 -> (B, output_dim) f32 via the single fused kernel."""
    B, in_dim = x.shape
    Dp = pk["w0"].shape[0]
    Op = pk["w3"].shape[1]
    n_res = int(pk["rw1"].shape[0])

    # Batch tiling: up to 256 rows per tile (bigger tiles amortize per-step overhead and
    # keep the MXU fed), always a multiple of 8 sublanes.
    tb = min(256, _round_up(B, SUBLANE))
    Bp = _round_up(B, tb)
    nb = Bp // tb

    xp = jnp.pad(x, ((0, Bp - B), (0, Dp - in_dim)))

    kernel = functools.partial(_generator_kernel, n_res=n_res)
    out = pl.pallas_call(
        kernel,
        grid=(nb,),
        in_specs=[
            pl.BlockSpec((tb, Dp), lambda b: (b, 0)),     # activation tile streams over batch
            _resident(pk["w0"]), _resident(pk["b0"]),
            _resident(pk["w1"]), _resident(pk["b1"]),
            _resident(pk["rw1"]), _resident(pk["rb1"]),
            _resident(pk["rw2"]), _resident(pk["rb2"]),
            _resident(pk["w2"]), _resident(pk["b2"]),
            _resident(pk["w3"]), _resident(pk["b3"]),
        ],
        out_specs=pl.BlockSpec((tb, Op), lambda b: (b, 0)),
        out_shape=jax.ShapeDtypeStruct((Bp, Op), jnp.float32),
        compiler_params=pltpu.CompilerParams(
            dimension_semantics=("parallel",),
            vmem_limit_bytes=48 * 1024 * 1024,  # headroom for larger hidden dims; safe on v5e/v6e/v7x
        ),
    )(xp, pk["w0"], pk["b0"], pk["w1"], pk["b1"],
      pk["rw1"], pk["rb1"], pk["rw2"], pk["rb2"],
      pk["w2"], pk["b2"], pk["w3"], pk["b3"])

    return out[:B, :pk["out_dim"]]


# ------------------------------ parameter setup ----------------------------- #

def init_linear(key, fan_in, fan_out):
    # PyTorch nn.Linear default init: U(-1/sqrt(fan_in), 1/sqrt(fan_in)).
    kw, kb = jax.random.split(key)
    bound = 1.0 / float(fan_in) ** 0.5
    w = jax.random.uniform(kw, (fan_in, fan_out), jnp.float32, -bound, bound)  # stored (in, out)
    b = jax.random.uniform(kb, (1, fan_out), jnp.float32, -bound, bound)
    return w, b


def init_bn(key, feat, eps=1e-5):
    # Synthetic (deterministic) gamma/beta; running stats at their init values (eval mode).
    kg, kb = jax.random.split(key)
    gamma = 1.0 + 0.1 * jax.random.normal(kg, (1, feat), jnp.float32)
    beta = 0.1 * jax.random.normal(kb, (1, feat), jnp.float32)
    running_mean = jnp.zeros((1, feat), jnp.float32)
    running_var = jnp.ones((1, feat), jnp.float32)
    scale = gamma / jnp.sqrt(running_var + eps)
    shift = beta - running_mean * scale
    return scale, shift


def init_generator_params(key, input_dim, output_dim, hidden_dim, n_residual_blocks):
    """Raw (PyTorch-semantics) parameters: per layer (W, b) plus eval-mode BN (scale, shift)."""
    h2 = hidden_dim // 2
    keys = iter(jax.random.split(key, 8 + 4 * n_residual_blocks))
    p = {}
    p["lin0_w"], p["lin0_b"] = init_linear(next(keys), input_dim, h2)
    p["bn0_s"], p["bn0_sh"] = init_bn(next(keys), h2)
    p["lin1_w"], p["lin1_b"] = init_linear(next(keys), h2, hidden_dim)
    p["bn1_s"], p["bn1_sh"] = init_bn(next(keys), hidden_dim)
    p["res"] = []
    for _ in range(n_residual_blocks):
        w1, b1 = init_linear(next(keys), hidden_dim, hidden_dim)
        s1, sh1 = init_bn(next(keys), hidden_dim)
        w2, b2 = init_linear(next(keys), hidden_dim, hidden_dim)
        s2, sh2 = init_bn(next(keys), hidden_dim)
        p["res"].append(dict(w1=w1, b1=b1, s1=s1, sh1=sh1, w2=w2, b2=b2, s2=s2, sh2=sh2))
    p["lin2_w"], p["lin2_b"] = init_linear(next(keys), hidden_dim, h2)
    p["bn2_s"], p["bn2_sh"] = init_bn(next(keys), h2)
    p["lin3_w"], p["lin3_b"] = init_linear(next(keys), h2, output_dim)
    return p


def _fold_bn(w, b, s, sh):
    # (x@W + b)*s + sh  ==  x @ (W*s) + (b*s + sh)
    return w * s, b * s + sh


def _pad2(a, rows, cols):
    return jnp.pad(a, ((0, rows - a.shape[0]), (0, cols - a.shape[1])))


def pack_params(p):
    """Fold BN into weights, zero-pad every feature dim to a multiple of 128 lanes,
    and stack the residual-block weights for the fused kernel."""
    input_dim = p["lin0_w"].shape[0]
    h2 = p["lin0_w"].shape[1]
    hidden = p["lin1_w"].shape[1]
    output_dim = p["lin3_w"].shape[1]

    Dp = _round_up(input_dim, LANE)
    H2p = _round_up(h2, LANE)
    Hp = _round_up(hidden, LANE)
    Op = _round_up(output_dim, LANE)

    pk = {"out_dim": output_dim}

    w0, b0 = _fold_bn(p["lin0_w"], p["lin0_b"], p["bn0_s"], p["bn0_sh"])
    pk["w0"], pk["b0"] = _pad2(w0, Dp, H2p), _pad2(b0, 1, H2p)

    w1, b1 = _fold_bn(p["lin1_w"], p["lin1_b"], p["bn1_s"], p["bn1_sh"])
    pk["w1"], pk["b1"] = _pad2(w1, H2p, Hp), _pad2(b1, 1, Hp)

    rw1, rb1, rw2, rb2 = [], [], [], []
    for rp in p["res"]:
        a, c = _fold_bn(rp["w1"], rp["b1"], rp["s1"], rp["sh1"])
        d, e = _fold_bn(rp["w2"], rp["b2"], rp["s2"], rp["sh2"])
        rw1.append(_pad2(a, Hp, Hp)); rb1.append(_pad2(c, 1, Hp))
        rw2.append(_pad2(d, Hp, Hp)); rb2.append(_pad2(e, 1, Hp))
    pk["rw1"] = jnp.stack(rw1); pk["rb1"] = jnp.stack(rb1)
    pk["rw2"] = jnp.stack(rw2); pk["rb2"] = jnp.stack(rb2)

    w2, b2 = _fold_bn(p["lin2_w"], p["lin2_b"], p["bn2_s"], p["bn2_sh"])
    pk["w2"], pk["b2"] = _pad2(w2, Hp, H2p), _pad2(b2, 1, H2p)

    # Final layer has no BN.
    pk["w3"], pk["b3"] = _pad2(p["lin3_w"], H2p, Op), _pad2(p["lin3_b"], 1, Op)
    return pk


# ------------------------------ plain-JAX reference -------------------------- #

def generator_reference(x, p):
    """Plain-JAX reference with unfused, unfolded params (eval-mode semantics)."""
    def lba(h, w, b, s, sh, act):
        y = h @ w + b
        y = y * s + sh
        if act == "relu":
            y = jnp.maximum(y, 0.0)
        elif act == "tanh":
            y = jnp.tanh(y)
        return y

    ones = lambda f: jnp.ones((1, f), jnp.float32)
    zeros = lambda f: jnp.zeros((1, f), jnp.float32)

    h = lba(x, p["lin0_w"], p["lin0_b"], p["bn0_s"], p["bn0_sh"], "relu")
    h = lba(h, p["lin1_w"], p["lin1_b"], p["bn1_s"], p["bn1_sh"], "relu")
    for rp in p["res"]:
        t = lba(h, rp["w1"], rp["b1"], rp["s1"], rp["sh1"], "relu")
        t = lba(t, rp["w2"], rp["b2"], rp["s2"], rp["sh2"], "none")
        h = h + t
    h = lba(h, p["lin2_w"], p["lin2_b"], p["bn2_s"], p["bn2_sh"], "relu")
    od = p["lin3_w"].shape[1]
    return lba(h, p["lin3_w"], p["lin3_b"], ones(od), zeros(od), "tanh")


# ---------------------------------- main ------------------------------------ #

if __name__ == "__main__":
    key = jax.random.PRNGKey(0)
    k_x, k_p = jax.random.split(key)

    # Small shapes consistent with the module's forward (2-D inputs: (batch, features)).
    B, INPUT_DIM, OUTPUT_DIM, HIDDEN_DIM, N_RES = 8, 16, 16, 64, 3

    x = jax.random.normal(k_x, (B, INPUT_DIM), jnp.float32)
    raw_params = init_generator_params(k_p, INPUT_DIM, OUTPUT_DIM, HIDDEN_DIM, N_RES)
    packed = pack_params(raw_params)

    out = generator_forward(x, packed)
    out = jax.block_until_ready(out)

    ref = generator_reference(x, raw_params)
    assert out.shape == (B, OUTPUT_DIM), out.shape
    assert jnp.allclose(out, ref, atol=1e-5, rtol=1e-5), "mismatch vs reference"

    print("KERNEL_OK")
</pallas_src>

<mosaic_0001>
module attributes {stable_mosaic.version = 11 : i64} {
  func.func @_generator_kernel(%arg0: i32, %arg1: memref<8x128xf32, #tpu.memory_space<vmem>>, %arg2: memref<128x128xf32, #tpu.memory_space<vmem>>, %arg3: memref<1x128xf32, #tpu.memory_space<vmem>>, %arg4: memref<128x128xf32, #tpu.memory_space<vmem>>, %arg5: memref<1x128xf32, #tpu.memory_space<vmem>>, %arg6: memref<3x128x128xf32, #tpu.memory_space<vmem>>, %arg7: memref<3x1x128xf32, #tpu.memory_space<vmem>>, %arg8: memref<3x128x128xf32, #tpu.memory_space<vmem>>, %arg9: memref<3x1x128xf32, #tpu.memory_space<vmem>>, %arg10: memref<128x128xf32, #tpu.memory_space<vmem>>, %arg11: memref<1x128xf32, #tpu.memory_space<vmem>>, %arg12: memref<128x128xf32, #tpu.memory_space<vmem>>, %arg13: memref<1x128xf32, #tpu.memory_space<vmem>>, %arg14: memref<8x128xf32, #tpu.memory_space<vmem>>) attributes {dimension_semantics = [#tpu.dimension_semantics<parallel>], iteration_bounds = array<i64: 1>, scalar_prefetch = 0 : i64, scratch_operands = 0 : i64, tpu.core_type = #tpu.core_type<tc>, window_params = [{transform_indices = @transform_0, window_bounds = array<i64: 8, 128>}, {pipeline_mode = #tpu.pipeline_mode<synchronous>, transform_indices = @transform_1, window_bounds = array<i64: 128, 128>}, {pipeline_mode = #tpu.pipeline_mode<synchronous>, transform_indices = @transform_2, window_bounds = array<i64: 1, 128>}, {pipeline_mode = #tpu.pipeline_mode<synchronous>, transform_indices = @transform_3, window_bounds = array<i64: 128, 128>}, {pipeline_mode = #tpu.pipeline_mode<synchronous>, transform_indices = @transform_4, window_bounds = array<i64: 1, 128>}, {pipeline_mode = #tpu.pipeline_mode<synchronous>, transform_indices = @transform_5, window_bounds = array<i64: 3, 128, 128>}, {pipeline_mode = #tpu.pipeline_mode<synchronous>, transform_indices = @transform_6, window_bounds = array<i64: 3, 1, 128>}, {pipeline_mode = #tpu.pipeline_mode<synchronous>, transform_indices = @transform_7, window_bounds = array<i64: 3, 128, 128>}, {pipeline_mode = #tpu.pipeline_mode<synchronous>, transform_indices = @transform_8, window_bounds = array<i64: 3, 1, 128>}, {pipeline_mode = #tpu.pipeline_mode<synchronous>, transform_indices = @transform_9, window_bounds = array<i64: 128, 128>}, {pipeline_mode = #tpu.pipeline_mode<synchronous>, transform_indices = @transform_10, window_bounds = array<i64: 1, 128>}, {pipeline_mode = #tpu.pipeline_mode<synchronous>, transform_indices = @transform_11, window_bounds = array<i64: 128, 128>}, {pipeline_mode = #tpu.pipeline_mode<synchronous>, transform_indices = @transform_12, window_bounds = array<i64: 1, 128>}, {transform_indices = @transform_13, window_bounds = array<i64: 8, 128>}]} {
    %c0 = arith.constant 0 : index
    %c0_0 = arith.constant 0 : index
    %0 = vector.load %arg1[%c0, %c0_0] : memref<8x128xf32, #tpu.memory_space<vmem>>, vector<8x128xf32>
    %c0_1 = arith.constant 0 : index
    %c0_2 = arith.constant 0 : index
    %1 = vector.load %arg2[%c0_1, %c0_2] : memref<128x128xf32, #tpu.memory_space<vmem>>, vector<128x128xf32>
    %cst = arith.constant dense<0.000000e+00> : vector<8x128xf32>
    %2 = tpu.matmul %0, %1, %cst {dimension_numbers = #tpu.dot_dimension_numbers<[1], [0], [0], [1], [0, 0, 1, 1], [], []>} : vector<8x128xf32>, vector<128x128xf32>, vector<8x128xf32> -> vector<8x128xf32>
    %c0_3 = arith.constant 0 : index
    %c0_4 = arith.constant 0 : index
    %3 = vector.load %arg3[%c0_3, %c0_4] : memref<1x128xf32, #tpu.memory_space<vmem>>, vector<1x128xf32>
    %4 = vector.broadcast %3 : vector<1x128xf32> to vector<8x128xf32>
    %5 = arith.addf %2, %4 : vector<8x128xf32>
    %cst_5 = arith.constant 0.000000e+00 : f32
    %6 = vector.broadcast %cst_5 : f32 to vector<8x128xf32>
    %7 = arith.maximumf %5, %6 : vector<8x128xf32>
    %c0_6 = arith.constant 0 : index
    %c0_7 = arith.constant 0 : index
    %8 = vector.load %arg4[%c0_6, %c0_7] : memref<128x128xf32, #tpu.memory_space<vmem>>, vector<128x128xf32>
    %cst_8 = arith.constant dense<0.000000e+00> : vector<8x128xf32>
    %9 = tpu.matmul %7, %8, %cst_8 {dimension_numbers = #tpu.dot_dimension_numbers<[1], [0], [0], [1], [0, 0, 1, 1], [], []>} : vector<8x128xf32>, vector<128x128xf32>, vector<8x128xf32> -> vector<8x128xf32>
    %c0_9 = arith.constant 0 : index
    %c0_10 = arith.constant 0 : index
    %10 = vector.load %arg5[%c0_9, %c0_10] : memref<1x128xf32, #tpu.memory_space<vmem>>, vector<1x128xf32>
    %11 = vector.broadcast %10 : vector<1x128xf32> to vector<8x128xf32>
    %12 = arith.addf %9, %11 : vector<8x128xf32>
    %cst_11 = arith.constant 0.000000e+00 : f32
    %13 = vector.broadcast %cst_11 : f32 to vector<8x128xf32>
    %14 = arith.maximumf %12, %13 : vector<8x128xf32>
    %c0_i32 = arith.constant 0 : i32
    %15 = arith.index_cast %c0_i32 : i32 to index
    %c0_12 = arith.constant 0 : index
    %c0_13 = arith.constant 0 : index
    %16 = vector.load %arg6[%15, %c0_12, %c0_13] : memref<3x128x128xf32, #tpu.memory_space<vmem>>, vector<1x128x128xf32>
    %17 = vector.shape_cast %16 : vector<1x128x128xf32> to vector<128x128xf32>
    %cst_14 = arith.constant dense<0.000000e+00> : vector<8x128xf32>
    %18 = tpu.matmul %14, %17, %cst_14 {dimension_numbers = #tpu.dot_dimension_numbers<[1], [0], [0], [1], [0, 0, 1, 1], [], []>} : vector<8x128xf32>, vector<128x128xf32>, vector<8x128xf32> -> vector<8x128xf32>
    %19 = arith.index_cast %c0_i32 : i32 to index
    %c0_15 = arith.constant 0 : index
    %c0_16 = arith.constant 0 : index
    %20 = vector.load %arg7[%19, %c0_15, %c0_16] : memref<3x1x128xf32, #tpu.memory_space<vmem>>, vector<1x1x128xf32>
    %21 = vector.shape_cast %20 : vector<1x1x128xf32> to vector<1x128xf32>
    %22 = vector.broadcast %21 : vector<1x128xf32> to vector<8x128xf32>
    %23 = arith.addf %18, %22 : vector<8x128xf32>
    %cst_17 = arith.constant 0.000000e+00 : f32
    %24 = vector.broadcast %cst_17 : f32 to vector<8x128xf32>
    %25 = arith.maximumf %23, %24 : vector<8x128xf32>
    %26 = arith.index_cast %c0_i32 : i32 to index
    %c0_18 = arith.constant 0 : index
    %c0_19 = arith.constant 0 : index
    %27 = vector.load %arg8[%26, %c0_18, %c0_19] : memref<3x128x128xf32, #tpu.memory_space<vmem>>, vector<1x128x128xf32>
    %28 = vector.shape_cast %27 : vector<1x128x128xf32> to vector<128x128xf32>
    %cst_20 = arith.constant dense<0.000000e+00> : vector<8x128xf32>
    %29 = tpu.matmul %25, %28, %cst_20 {dimension_numbers = #tpu.dot_dimension_numbers<[1], [0], [0], [1], [0, 0, 1, 1], [], []>} : vector<8x128xf32>, vector<128x128xf32>, vector<8x128xf32> -> vector<8x128xf32>
    %30 = arith.index_cast %c0_i32 : i32 to index
    %c0_21 = arith.constant 0 : index
    %c0_22 = arith.constant 0 : index
    %31 = vector.load %arg9[%30, %c0_21, %c0_22] : memref<3x1x128xf32, #tpu.memory_space<vmem>>, vector<1x1x128xf32>
    %32 = vector.shape_cast %31 : vector<1x1x128xf32> to vector<1x128xf32>
    %33 = vector.broadcast %32 : vector<1x128xf32> to vector<8x128xf32>
    %34 = arith.addf %29, %33 : vector<8x128xf32>
    %35 = arith.addf %14, %34 : vector<8x128xf32>
    %c1_i32 = arith.constant 1 : i32
    %36 = arith.index_cast %c1_i32 : i32 to index
    %c0_23 = arith.constant 0 : index
    %c0_24 = arith.constant 0 : index
    %37 = vector.load %arg6[%36, %c0_23, %c0_24] : memref<3x128x128xf32, #tpu.memory_space<vmem>>, vector<1x128x128xf32>
    %38 = vector.shape_cast %37 : vector<1x128x128xf32> to vector<128x128xf32>
    %cst_25 = arith.constant dense<0.000000e+00> : vector<8x128xf32>
    %39 = tpu.matmul %35, %38, %cst_25 {dimension_numbers = #tpu.dot_dimension_numbers<[1], [0], [0], [1], [0, 0, 1, 1], [], []>} : vector<8x128xf32>, vector<128x128xf32>, vector<8x128xf32> -> vector<8x128xf32>
    %40 = arith.index_cast %c1_i32 : i32 to index
    %c0_26 = arith.constant 0 : index
    %c0_27 = arith.constant 0 : index
    %41 = vector.load %arg7[%40, %c0_26, %c0_27] : memref<3x1x128xf32, #tpu.memory_space<vmem>>, vector<1x1x128xf32>
    %42 = vector.shape_cast %41 : vector<1x1x128xf32> to vector<1x128xf32>
    %43 = vector.broadcast %42 : vector<1x128xf32> to vector<8x128xf32>
    %44 = arith.addf %39, %43 : vector<8x128xf32>
    %cst_28 = arith.constant 0.000000e+00 : f32
    %45 = vector.broadcast %cst_28 : f32 to vector<8x128xf32>
    %46 = arith.maximumf %44, %45 : vector<8x128xf32>
    %47 = arith.index_cast %c1_i32 : i32 to index
    %c0_29 = arith.constant 0 : index
    %c0_30 = arith.constant 0 : index
    %48 = vector.load %arg8[%47, %c0_29, %c0_30] : memref<3x128x128xf32, #tpu.memory_space<vmem>>, vector<1x128x128xf32>
    %49 = vector.shape_cast %48 : vector<1x128x128xf32> to vector<128x128xf32>
    %cst_31 = arith.constant dense<0.000000e+00> : vector<8x128xf32>
    %50 = tpu.matmul %46, %49, %cst_31 {dimension_numbers = #tpu.dot_dimension_numbers<[1], [0], [0], [1], [0, 0, 1, 1], [], []>} : vector<8x128xf32>, vector<128x128xf32>, vector<8x128xf32> -> vector<8x128xf32>
    %51 = arith.index_cast %c1_i32 : i32 to index
    %c0_32 = arith.constant 0 : index
    %c0_33 = arith.constant 0 : index
    %52 = vector.load %arg9[%51, %c0_32, %c0_33] : memref<3x1x128xf32, #tpu.memory_space<vmem>>, vector<1x1x128xf32>
    %53 = vector.shape_cast %52 : vector<1x1x128xf32> to vector<1x128xf32>
    %54 = vector.broadcast %53 : vector<1x128xf32> to vector<8x128xf32>
    %55 = arith.addf %50, %54 : vector<8x128xf32>
    %56 = arith.addf %35, %55 : vector<8x128xf32>
    %c2_i32 = arith.constant 2 : i32
    %57 = arith.index_cast %c2_i32 : i32 to index
    %c0_34 = arith.constant 0 : index
    %c0_35 = arith.constant 0 : index
    %58 = vector.load %arg6[%57, %c0_34, %c0_35] : memref<3x128x128xf32, #tpu.memory_space<vmem>>, vector<1x128x128xf32>
    %59 = vector.shape_cast %58 : vector<1x128x128xf32> to vector<128x128xf32>
    %cst_36 = arith.constant dense<0.000000e+00> : vector<8x128xf32>
    %60 = tpu.matmul %56, %59, %cst_36 {dimension_numbers = #tpu.dot_dimension_numbers<[1], [0], [0], [1], [0, 0, 1, 1], [], []>} : vector<8x128xf32>, vector<128x128xf32>, vector<8x128xf32> -> vector<8x128xf32>
    %61 = arith.index_cast %c2_i32 : i32 to index
    %c0_37 = arith.constant 0 : index
    %c0_38 = arith.constant 0 : index
    %62 = vector.load %arg7[%61, %c0_37, %c0_38] : memref<3x1x128xf32, #tpu.memory_space<vmem>>, vector<1x1x128xf32>
    %63 = vector.shape_cast %62 : vector<1x1x128xf32> to vector<1x128xf32>
    %64 = vector.broadcast %63 : vector<1x128xf32> to vector<8x128xf32>
    %65 = arith.addf %60, %64 : vector<8x128xf32>
    %cst_39 = arith.constant 0.000000e+00 : f32
    %66 = vector.broadcast %cst_39 : f32 to vector<8x128xf32>
    %67 = arith.maximumf %65, %66 : vector<8x128xf32>
    %68 = arith.index_cast %c2_i32 : i32 to index
    %c0_40 = arith.constant 0 : index
    %c0_41 = arith.constant 0 : index
    %69 = vector.load %arg8[%68, %c0_40, %c0_41] : memref<3x128x128xf32, #tpu.memory_space<vmem>>, vector<1x128x128xf32>
    %70 = vector.shape_cast %69 : vector<1x128x128xf32> to vector<128x128xf32>
    %cst_42 = arith.constant dense<0.000000e+00> : vector<8x128xf32>
    %71 = tpu.matmul %67, %70, %cst_42 {dimension_numbers = #tpu.dot_dimension_numbers<[1], [0], [0], [1], [0, 0, 1, 1], [], []>} : vector<8x128xf32>, vector<128x128xf32>, vector<8x128xf32> -> vector<8x128xf32>
    %72 = arith.index_cast %c2_i32 : i32 to index
    %c0_43 = arith.constant 0 : index
    %c0_44 = arith.constant 0 : index
    %73 = vector.load %arg9[%72, %c0_43, %c0_44] : memref<3x1x128xf32, #tpu.memory_space<vmem>>, vector<1x1x128xf32>
    %74 = vector.shape_cast %73 : vector<1x1x128xf32> to vector<1x128xf32>
    %75 = vector.broadcast %74 : vector<1x128xf32> to vector<8x128xf32>
    %76 = arith.addf %71, %75 : vector<8x128xf32>
    %77 = arith.addf %56, %76 : vector<8x128xf32>
    %c3_i32 = arith.constant 3 : i32
    %c0_45 = arith.constant 0 : index
    %c0_46 = arith.constant 0 : index
    %78 = vector.load %arg10[%c0_45, %c0_46] : memref<128x128xf32, #tpu.memory_space<vmem>>, vector<128x128xf32>
    %cst_47 = arith.constant dense<0.000000e+00> : vector<8x128xf32>
    %79 = tpu.matmul %77, %78, %cst_47 {dimension_numbers = #tpu.dot_dimension_numbers<[1], [0], [0], [1], [0, 0, 1, 1], [], []>} : vector<8x128xf32>, vector<128x128xf32>, vector<8x128xf32> -> vector<8x128xf32>
    %c0_48 = arith.constant 0 : index
    %c0_49 = arith.constant 0 : index
    %80 = vector.load %arg11[%c0_48, %c0_49] : memref<1x128xf32, #tpu.memory_space<vmem>>, vector<1x128xf32>
    %81 = vector.broadcast %80 : vector<1x128xf32> to vector<8x128xf32>
    %82 = arith.addf %79, %81 : vector<8x128xf32>
    %cst_50 = arith.constant 0.000000e+00 : f32
    %83 = vector.broadcast %cst_50 : f32 to vector<8x128xf32>
    %84 = arith.maximumf %82, %83 : vector<8x128xf32>
    %c0_51 = arith.constant 0 : index
    %c0_52 = arith.constant 0 : index
    %85 = vector.load %arg12[%c0_51, %c0_52] : memref<128x128xf32, #tpu.memory_space<vmem>>, vector<128x128xf32>
    %cst_53 = arith.constant dense<0.000000e+00> : vector<8x128xf32>
    %86 = tpu.matmul %84, %85, %cst_53 {dimension_numbers = #tpu.dot_dimension_numbers<[1], [0], [0], [1], [0, 0, 1, 1], [], []>} : vector<8x128xf32>, vector<128x128xf32>, vector<8x128xf32> -> vector<8x128xf32>
    %c0_54 = arith.constant 0 : index
    %c0_55 = arith.constant 0 : index
    %87 = vector.load %arg13[%c0_54, %c0_55] : memref<1x128xf32, #tpu.memory_space<vmem>>, vector<1x128xf32>
    %88 = vector.broadcast %87 : vector<1x128xf32> to vector<8x128xf32>
    %89 = arith.addf %86, %88 : vector<8x128xf32>
    %90 = math.tanh %89 : vector<8x128xf32>
    %c0_56 = arith.constant 0 : index
    %c0_57 = arith.constant 0 : index
    %91 = vector.load %arg14[%c0_56, %c0_57] : memref<8x128xf32, #tpu.memory_space<vmem>>, vector<8x128xf32>
    tpu.vector_store %arg14[%c0_56, %c0_57], %90 {strides = array<i32>} : memref<8x128xf32, #tpu.memory_space<vmem>>, vector<8x128xf32>,
    return
  }
  func.func @transform_0(%arg0: i32) -> (i32, i32) {
    %c0_i32 = arith.constant 0 : i32
    %c0_i32_0 = arith.constant 0 : i32
    return %arg0, %c0_i32 : i32, i32
  }
  func.func @transform_1(%arg0: i32) -> (i32, i32) {
    %c0_i32 = arith.constant 0 : i32
    %c0_i32_0 = arith.constant 0 : i32
    %c0_i32_1 = arith.constant 0 : i32
    return %c0_i32, %c0_i32_0 : i32, i32
  }
  func.func @transform_2(%arg0: i32) -> (i32, i32) {
    %c0_i32 = arith.constant 0 : i32
    %c0_i32_0 = arith.constant 0 : i32
    %c0_i32_1 = arith.constant 0 : i32
    return %c0_i32, %c0_i32_0 : i32, i32
  }
  func.func @transform_3(%arg0: i32) -> (i32, i32) {
    %c0_i32 = arith.constant 0 : i32
    %c0_i32_0 = arith.constant 0 : i32
    %c0_i32_1 = arith.constant 0 : i32
    return %c0_i32, %c0_i32_0 : i32, i32
  }
  func.func @transform_4(%arg0: i32) -> (i32, i32) {
    %c0_i32 = arith.constant 0 : i32
    %c0_i32_0 = arith.constant 0 : i32
    %c0_i32_1 = arith.constant 0 : i32
    return %c0_i32, %c0_i32_0 : i32, i32
  }
  func.func @transform_5(%arg0: i32) -> (i32, i32, i32) {
    %c0_i32 = arith.constant 0 : i32
    %c0_i32_0 = arith.constant 0 : i32
    %c0_i32_1 = arith.constant 0 : i32
    %c0_i32_2 = arith.constant 0 : i32
    return %c0_i32, %c0_i32_0, %c0_i32_1 : i32, i32, i32
  }
  func.func @transform_6(%arg0: i32) -> (i32, i32, i32) {
    %c0_i32 = arith.constant 0 : i32
    %c0_i32_0 = arith.constant 0 : i32
    %c0_i32_1 = arith.constant 0 : i32
    %c0_i32_2 = arith.constant 0 : i32
    return %c0_i32, %c0_i32_0, %c0_i32_1 : i32, i32, i32
  }
  func.func @transform_7(%arg0: i32) -> (i32, i32, i32) {
    %c0_i32 = arith.constant 0 : i32
    %c0_i32_0 = arith.constant 0 : i32
    %c0_i32_1 = arith.constant 0 : i32
    %c0_i32_2 = arith.constant 0 : i32
    return %c0_i32, %c0_i32_0, %c0_i32_1 : i32, i32, i32
  }
  func.func @transform_8(%arg0: i32) -> (i32, i32, i32) {
    %c0_i32 = arith.constant 0 : i32
    %c0_i32_0 = arith.constant 0 : i32
    %c0_i32_1 = arith.constant 0 : i32
    %c0_i32_2 = arith.constant 0 : i32
    return %c0_i32, %c0_i32_0, %c0_i32_1 : i32, i32, i32
  }
  func.func @transform_9(%arg0: i32) -> (i32, i32) {
    %c0_i32 = arith.constant 0 : i32
    %c0_i32_0 = arith.constant 0 : i32
    %c0_i32_1 = arith.constant 0 : i32
    return %c0_i32, %c0_i32_0 : i32, i32
  }
  func.func @transform_10(%arg0: i32) -> (i32, i32) {
    %c0_i32 = arith.constant 0 : i32
    %c0_i32_0 = arith.constant 0 : i32
    %c0_i32_1 = arith.constant 0 : i32
    return %c0_i32, %c0_i32_0 : i32, i32
  }
  func.func @transform_11(%arg0: i32) -> (i32, i32) {
    %c0_i32 = arith.constant 0 : i32
    %c0_i32_0 = arith.constant 0 : i32
    %c0_i32_1 = arith.constant 0 : i32
    return %c0_i32, %c0_i32_0 : i32, i32
  }
  func.func @transform_12(%arg0: i32) -> (i32, i32) {
    %c0_i32 = arith.constant 0 : i32
    %c0_i32_0 = arith.constant 0 : i32
    %c0_i32_1 = arith.constant 0 : i32
    return %c0_i32, %c0_i32_0 : i32, i32
  }
  func.func @transform_13(%arg0: i32) -> (i32, i32) {
    %c0_i32 = arith.constant 0 : i32
    %c0_i32_0 = arith.constant 0 : i32
    return %arg0, %c0_i32 : i32, i32
  }
}

</mosaic_0001>

<llo_original>
// kernel: tpu_custom_call.1
$region0: #{tpu_custom_call.1}
  #allocation0 [shape = 'u32[]', space=smem, size = 0x4, offset = 0x4, fixed_abs, tag = 'smem constant byte address 0x4 - core index']
  #allocation1 [shape = 'u32[72,128]{1,0:T(1,128)}', space=vmem, size = 0x9000, scoped, tag = 'internal scratch']
  %s0 = inlined_call_operand.hbm [shape: f32[8,128], index: 0, kind: input, shape index: {}]
  %s1 = inlined_call_operand.hbm [shape: f32[128,128], index: 1, kind: input, shape index: {}]
  %s2 = inlined_call_operand.hbm [shape: f32[1,128], index: 2, kind: input, shape index: {}]
  %s3 = inlined_call_operand.hbm [shape: f32[128,128], index: 3, kind: input, shape index: {}]
  %s4 = inlined_call_operand.hbm [shape: f32[1,128], index: 4, kind: input, shape index: {}]
  %s5 = inlined_call_operand.hbm [shape: f32[3,128,128], index: 5, kind: input, shape index: {}]
  %s6 = inlined_call_operand.vmem [shape: f32[3,1,128], index: 6, kind: input, shape index: {}]
  %s7 = inlined_call_operand.hbm [shape: f32[3,128,128], index: 7, kind: input, shape index: {}]
  %s8 = inlined_call_operand.vmem [shape: f32[3,1,128], index: 8, kind: input, shape index: {}]
  %s9 = inlined_call_operand.hbm [shape: f32[128,128], index: 9, kind: input, shape index: {}]
  %s10 = inlined_call_operand.vmem [shape: f32[1,128], index: 10, kind: input, shape index: {}]
  %s11 = inlined_call_operand.hbm [shape: f32[128,128], index: 11, kind: input, shape index: {}]
  %s12 = inlined_call_operand.vmem [shape: f32[1,128], index: 12, kind: input, shape index: {}]
  %s13 = inlined_call_operand.hbm [shape: f32[8,128], index: 13, kind: output, shape index: {}]
  %s14 = sld [smem:[#allocation0]]
  $region98: #{tpu_custom_call.1} parent=0
    _
  %s16 = ssub.s32 1, %s14
  %s17 = scalar_select 0, %s16, %s14
  $region1: #{tpu_custom_call.1} parent=0
    #allocation2 [shape = 'u8[4096]{0}', space=vmem, size = 0x1000, scoped, tag = 'input window, operand 0, single buffered']
    #allocation3 [shape = 's32[1]{0}', space=sflag, size = 0x4, scoped, tag = 'scoped memory for tpu_custom_call.1']
    #allocation4 [shape = 's32[1]{0}', space=sflag, size = 0x4, scoped, tag = 'scoped memory for tpu_custom_call.1']
    #allocation5 [shape = 'u8[65536]{0}', space=vmem, size = 0x10000, scoped, tag = 'input window, operand 1, single buffered']
    #allocation6 [shape = 's32[1]{0}', space=sflag, size = 0x4, scoped, tag = 'scoped memory for tpu_custom_call.1']
    #allocation7 [shape = 'u8[512]{0}', space=vmem, size = 0x400, scoped, tag = 'input window, operand 2, single buffered']
    #allocation8 [shape = 'u8[65536]{0}', space=vmem, size = 0x10000, scoped, tag = 'input window, operand 3, single buffered']
    #allocation9 [shape = 's32[1]{0}', space=sflag, size = 0x4, scoped, tag = 'scoped memory for tpu_custom_call.1']
    #allocation10 [shape = 'u8[512]{0}', space=vmem, size = 0x400, scoped, tag = 'input window, operand 4, single buffered']
    #allocation11 [shape = 'u8[196608]{0}', space=vmem, size = 0x30000, scoped, tag = 'input window, operand 5, single buffered']
    #allocation12 [shape = 's32[1]{0}', space=sflag, size = 0x4, scoped, tag = 'scoped memory for tpu_custom_call.1']
    #allocation13 [shape = 'u8[196608]{0}', space=vmem, size = 0x30000, scoped, tag = 'input window, operand 7, single buffered']
    #allocation14 [shape = 'u8[65536]{0}', space=vmem, size = 0x10000, scoped, tag = 'input window, operand 9, single buffered']
    #allocation15 [shape = 's32[1]{0}', space=sflag, size = 0x4, scoped, tag = 'scoped memory for tpu_custom_call.1']
    #allocation16 [shape = 'u8[65536]{0}', space=vmem, size = 0x10000, scoped, tag = 'input window, operand 11, single buffered']
    #allocation17 [shape = 'u8[4096]{0}', space=vmem, size = 0x1000, scoped, tag = 'output window, operand 0, single buffered']
    %18 = vsyncpa [#allocation3], 0
    %19 = vsyncpa [#allocation6], 0
    %20 = vsyncpa [#allocation9], 0
    %21 = vsyncpa [#allocation12], 0
    %22 = vsyncpa [#allocation15], 0
    %23 = vsyncpa [#allocation4], 0
    // Predicated region
    $region2: #{tpu_custom_call.1} parent=1 // pred_check
      _
    $region3: #{tpu_custom_call.1} parent=1 // pred_check_branch
      %25 = sbr.rel (0) target = $region5
    $region4: #{tpu_custom_call.1} parent=1 // pred_region
      %27 = vsyncadd [#allocation3], 0
      %s29 = sshll.u32 %s0, 4
      %s30 = int_to_ptr.hbm [resolvable:$true] %s29
      %s31 = sshll.u32 [#allocation2], 4
      %s32 = int_to_ptr.vmem [resolvable:$true] %s31
      %34 = dma.hbm_to_vmem [thread:$0]  %s30, 128, %s32, [#allocation3]
    $region5: #{tpu_custom_call.1} parent=1 // pred_fallthru
      _
    // Predicated region
    $region6: #{tpu_custom_call.1} parent=1 // pred_check
      _
    $region7: #{tpu_custom_call.1} parent=1 // pred_check_branch
      %36 = sbr.rel (0) target = $region9
    $region8: #{tpu_custom_call.1} parent=1 // pred_region
      %38 = vsyncadd [#allocation6], 0
      %s39 = sshll.u32 %s1, 4
      %s40 = int_to_ptr.hbm [resolvable:$true] %s39
      %s41 = sshll.u32 [#allocation5], 4
      %s42 = int_to_ptr.vmem [resolvable:$true] %s41
      %47 = dma.hbm_to_vmem [thread:$0]  %s40, 2048, %s42, [#allocation6], 128, 128, 8
    $region9: #{tpu_custom_call.1} parent=1 // pred_fallthru
      _
    // Predicated region
    $region10: #{tpu_custom_call.1} parent=1 // pred_check
      _
    $region11: #{tpu_custom_call.1} parent=1 // pred_check_branch
      %49 = sbr.rel (0) target = $region13
    $region12: #{tpu_custom_call.1} parent=1 // pred_region
      %51 = vsyncadd [#allocation6], 0
      %s53 = sshll.u32 %s2, 4
      %s54 = int_to_ptr.hbm [resolvable:$true] %s53
      %s55 = sshll.u32 [#allocation7], 4
      %s56 = int_to_ptr.vmem [resolvable:$true] %s55
      %58 = dma.hbm_to_vmem [thread:$0]  %s54, 16, %s56, [#allocation6]
    $region13: #{tpu_custom_call.1} parent=1 // pred_fallthru
      _
    // Predicated region
    $region14: #{tpu_custom_call.1} parent=1 // pred_check
      _
    $region15: #{tpu_custom_call.1} parent=1 // pred_check_branch
      %60 = sbr.rel (0) target = $region17
    $region16: #{tpu_custom_call.1} parent=1 // pred_region
      %62 = vsyncadd [#allocation9], 0
      %s63 = sshll.u32 %s3, 4
      %s64 = int_to_ptr.hbm [resolvable:$true] %s63
      %s65 = sshll.u32 [#allocation8], 4
      %s66 = int_to_ptr.vmem [resolvable:$true] %s65
      %71 = dma.hbm_to_vmem [thread:$0]  %s64, 2048, %s66, [#allocation9], 128, 128, 8
    $region17: #{tpu_custom_call.1} parent=1 // pred_fallthru
      _
    // Predicated region
    $region18: #{tpu_custom_call.1} parent=1 // pred_check
      _
    $region19: #{tpu_custom_call.1} parent=1 // pred_check_branch
      %73 = sbr.rel (0) target = $region21
    $region20: #{tpu_custom_call.1} parent=1 // pred_region
      %75 = vsyncadd [#allocation9], 0
      %s77 = sshll.u32 %s4, 4
      %s78 = int_to_ptr.hbm [resolvable:$true] %s77
      %s79 = sshll.u32 [#allocation10], 4
      %s80 = int_to_ptr.vmem [resolvable:$true] %s79
      %82 = dma.hbm_to_vmem [thread:$0]  %s78, 16, %s80, [#allocation9]
    $region21: #{tpu_custom_call.1} parent=1 // pred_fallthru
      _
    // Predicated region
    $region22: #{tpu_custom_call.1} parent=1 // pred_check
      _
    $region23: #{tpu_custom_call.1} parent=1 // pred_check_branch
      %84 = sbr.rel (0) target = $region25
    $region24: #{tpu_custom_call.1} parent=1 // pred_region
      %86 = vsyncadd [#allocation12], 0
      %s87 = sshll.u32 %s5, 4
      %s88 = int_to_ptr.hbm [resolvable:$true] %s87
      %s89 = sshll.u32 [#allocation11], 4
      %s90 = int_to_ptr.vmem [resolvable:$true] %s89
      %95 = dma.hbm_to_vmem [thread:$0]  %s88, 6144, %s90, [#allocation12], 128, 128, 8
    $region25: #{tpu_custom_call.1} parent=1 // pred_fallthru
      _
    // Predicated region
    $region26: #{tpu_custom_call.1} parent=1 // pred_check
      _
    $region27: #{tpu_custom_call.1} parent=1 // pred_check_branch
      %97 = sbr.rel (0) target = $region29
    $region28: #{tpu_custom_call.1} parent=1 // pred_region
      _
    $region29: #{tpu_custom_call.1} parent=1 // pred_fallthru
      _
    // Predicated region
    $region30: #{tpu_custom_call.1} parent=1 // pred_check
      _
    $region31: #{tpu_custom_call.1} parent=1 // pred_check_branch
      %99 = sbr.rel (0) target = $region33
    $region32: #{tpu_custom_call.1} parent=1 // pred_region
      %101 = vsyncadd [#allocation12], 0
      %s102 = sshll.u32 %s7, 4
      %s103 = int_to_ptr.hbm [resolvable:$true] %s102
      %s104 = sshll.u32 [#allocation13], 4
      %s105 = int_to_ptr.vmem [resolvable:$true] %s104
      %110 = dma.hbm_to_vmem [thread:$0]  %s103, 6144, %s105, [#allocation12], 128, 128, 8
    $region33: #{tpu_custom_call.1} parent=1 // pred_fallthru
      _
    // Predicated region
    $region34: #{tpu_custom_call.1} parent=1 // pred_check
      _
    $region35: #{tpu_custom_call.1} parent=1 // pred_check_branch
      %112 = sbr.rel (0) target = $region37
    $region36: #{tpu_custom_call.1} parent=1 // pred_region
      _
    $region37: #{tpu_custom_call.1} parent=1 // pred_fallthru
      _
    // Predicated region
    $region38: #{tpu_custom_call.1} parent=1 // pred_check
      _
    $region39: #{tpu_custom_call.1} parent=1 // pred_check_branch
      %114 = sbr.rel (0) target = $region41
    $region40: #{tpu_custom_call.1} parent=1 // pred_region
      %116 = vsyncadd [#allocation15], 0
      %s117 = sshll.u32 %s9, 4
      %s118 = int_to_ptr.hbm [resolvable:$true] %s117
      %s119 = sshll.u32 [#allocation14], 4
      %s120 = int_to_ptr.vmem [resolvable:$true] %s119
      %125 = dma.hbm_to_vmem [thread:$0]  %s118, 2048, %s120, [#allocation15], 128, 128, 8
    $region41: #{tpu_custom_call.1} parent=1 // pred_fallthru
      _
    // Predicated region
    $region42: #{tpu_custom_call.1} parent=1 // pred_check
      _
    $region43: #{tpu_custom_call.1} parent=1 // pred_check_branch
      %127 = sbr.rel (0) target = $region45
    $region44: #{tpu_custom_call.1} parent=1 // pred_region
      _
    $region45: #{tpu_custom_call.1} parent=1 // pred_fallthru
      _
    // Predicated region
    $region46: #{tpu_custom_call.1} parent=1 // pred_check
      _
    $region47: #{tpu_custom_call.1} parent=1 // pred_check_branch
      %129 = sbr.rel (0) target = $region49
    $region48: #{tpu_custom_call.1} parent=1 // pred_region
      %131 = vsyncadd [#allocation15], 0
      %s132 = sshll.u32 %s11, 4
      %s133 = int_to_ptr.hbm [resolvable:$true] %s132
      %s134 = sshll.u32 [#allocation16], 4
      %s135 = int_to_ptr.vmem [resolvable:$true] %s134
      %140 = dma.hbm_to_vmem [thread:$0]  %s133, 2048, %s135, [#allocation15], 128, 128, 8
    $region49: #{tpu_custom_call.1} parent=1 // pred_fallthru
      _
    // Predicated region
    $region50: #{tpu_custom_call.1} parent=1 // pred_check
      _
    $region51: #{tpu_custom_call.1} parent=1 // pred_check_branch
      %142 = sbr.rel (0) target = $region53
    $region52: #{tpu_custom_call.1} parent=1 // pred_region
      _
    $region53: #{tpu_custom_call.1} parent=1 // pred_fallthru
      _
    // Predicated region
    $region54: #{tpu_custom_call.1} parent=1 // pred_check
      _
    $region55: #{tpu_custom_call.1} parent=1 // pred_check_branch
      %144 = sbr.rel (0) target = $region57
    $region56: #{tpu_custom_call.1} parent=1 // pred_region
      %146 = dma.done [#allocation3], 128
    $region57: #{tpu_custom_call.1} parent=1 // pred_fallthru
      _
    // Predicated region
    $region58: #{tpu_custom_call.1} parent=1 // pred_check
      _
    $region59: #{tpu_custom_call.1} parent=1 // pred_check_branch
      %148 = sbr.rel (0) target = $region61
    $region60: #{tpu_custom_call.1} parent=1 // pred_region
      %150 = dma.done [#allocation6], 2048
    $region61: #{tpu_custom_call.1} parent=1 // pred_fallthru
      _
    // Predicated region
    $region62: #{tpu_custom_call.1} parent=1 // pred_check
      _
    $region63: #{tpu_custom_call.1} parent=1 // pred_check_branch
      %152 = sbr.rel (0) target = $region65
    $region64: #{tpu_custom_call.1} parent=1 // pred_region
      %154 = dma.done [#allocation6], 16
    $region65: #{tpu_custom_call.1} parent=1 // pred_fallthru
      _
    // Predicated region
    $region66: #{tpu_custom_call.1} parent=1 // pred_check
      _
    $region67: #{tpu_custom_call.1} parent=1 // pred_check_branch
      %156 = sbr.rel (0) target = $region69
    $region68: #{tpu_custom_call.1} parent=1 // pred_region
      %158 = dma.done [#allocation9], 2048
    $region69: #{tpu_custom_call.1} parent=1 // pred_fallthru
      _
    // Predicated region
    $region70: #{tpu_custom_call.1} parent=1 // pred_check
      _
    $region71: #{tpu_custom_call.1} parent=1 // pred_check_branch
      %160 = sbr.rel (0) target = $region73
    $region72: #{tpu_custom_call.1} parent=1 // pred_region
      %162 = dma.done [#allocation9], 16
    $region73: #{tpu_custom_call.1} parent=1 // pred_fallthru
      _
    // Predicated region
    $region74: #{tpu_custom_call.1} parent=1 // pred_check
      _
    $region75: #{tpu_custom_call.1} parent=1 // pred_check_branch
      %164 = sbr.rel (0) target = $region77
    $region76: #{tpu_custom_call.1} parent=1 // pred_region
      %166 = dma.done [#allocation12], 6144
    $region77: #{tpu_custom_call.1} parent=1 // pred_fallthru
      _
    // Predicated region
    $region78: #{tpu_custom_call.1} parent=1 // pred_check
      _
    $region79: #{tpu_custom_call.1} parent=1 // pred_check_branch
      %168 = sbr.rel (0) target = $region81
    $region80: #{tpu_custom_call.1} parent=1 // pred_region
      %170 = dma.done [#allocation12], 6144
    $region81: #{tpu_custom_call.1} parent=1 // pred_fallthru
      _
    // Predicated region
    $region82: #{tpu_custom_call.1} parent=1 // pred_check
      _
    $region83: #{tpu_custom_call.1} parent=1 // pred_check_branch
      %172 = sbr.rel (0) target = $region85
    $region84: #{tpu_custom_call.1} parent=1 // pred_region
      %174 = dma.done [#allocation15], 2048
    $region85: #{tpu_custom_call.1} parent=1 // pred_fallthru
      _
    // Predicated region
    $region86: #{tpu_custom_call.1} parent=1 // pred_check
      _
    $region87: #{tpu_custom_call.1} parent=1 // pred_check_branch
      %176 = sbr.rel (0) target = $region89
    $region88: #{tpu_custom_call.1} parent=1 // pred_region
      %178 = dma.done [#allocation15], 2048
    $region89: #{tpu_custom_call.1} parent=1 // pred_fallthru
      _
    %v179 = vld [vmem:[#allocation2] sm:$0xff]
    %v180 = vld [vmem:[#allocation5] sm:$0xff]
    %v181 = vld [vmem:[#allocation5 + $0x8] sm:$0xff]
    %v182 = vld [vmem:[#allocation5 + $0x10] sm:$0xff]
    %v183 = vld [vmem:[#allocation5 + $0x18] sm:$0xff]
    %v184 = vld [vmem:[#allocation5 + $0x20] sm:$0xff]
    %v185 = vld [vmem:[#allocation5 + $0x28] sm:$0xff]
    %v186 = vld [vmem:[#allocation5 + $0x30] sm:$0xff]
    %v187 = vld [vmem:[#allocation5 + $0x38] sm:$0xff]
    %v188 = vld [vmem:[#allocation5 + $0x40] sm:$0xff]
    %v189 = vld [vmem:[#allocation5 + $0x48] sm:$0xff]
    %v190 = vld [vmem:[#allocation5 + $0x50] sm:$0xff]
    %v191 = vld [vmem:[#allocation5 + $0x58] sm:$0xff]
    %v192 = vld [vmem:[#allocation5 + $0x60] sm:$0xff]
    %v193 = vld [vmem:[#allocation5 + $0x68] sm:$0xff]
    %v194 = vld [vmem:[#allocation5 + $0x70] sm:$0xff]
    %v195 = vld [vmem:[#allocation5 + $0x78] sm:$0xff]
    %v196 = vld [vmem:[#allocation7] sm:$0x1]
    %v198 = vperm.slane %v196, 0
    %200 = vmatpush.msra.mxu0 %v195
    %201 = vmatpush.msra.mxu0 %v194
    %202 = vmatpush.msra.mxu0 %v193
    %203 = vmatpush.msra.mxu0 %v192
    %204 = vmatpush.msra.mxu0 %v191
    %205 = vmatpush.msra.mxu0 %v190
    %206 = vmatpush.msra.mxu0 %v189
    %207 = vmatpush.msra.mxu0 %v188
    %208 = vmatpush.msra.mxu0 %v187
    %209 = vmatpush.msra.mxu0 %v186
    %210 = vmatpush.msra.mxu0 %v185
    %211 = vmatpush.msra.mxu0 %v184
    %212 = vmatpush.msra.mxu0 %v183
    %213 = vmatpush.msra.mxu0 %v182
    %214 = vmatpush.msra.mxu0 %v181
    %215 = vmatpush.msra.mxu0 %v180
    %216 = vmatmul.f32.gmra.mxu0 %v179
    %v217 = vpop.f32.mrf.mxu0
    %v218 = vadd.f32 %v198, %v217
    %219 = vdwg.mxu0
    %v220 = vmax.f32 %v218, 0.0
    %v221 = vld [vmem:[#allocation8] sm:$0xff]
    %v222 = vld [vmem:[#allocation8 + $0x8] sm:$0xff]
    %v223 = vld [vmem:[#allocation8 + $0x10] sm:$0xff]
    %v224 = vld [vmem:[#allocation8 + $0x18] sm:$0xff]
    %v225 = vld [vmem:[#allocation8 + $0x20] sm:$0xff]
    %v226 = vld [vmem:[#allocation8 + $0x28] sm:$0xff]
    %v227 = vld [vmem:[#allocation8 + $0x30] sm:$0xff]
    %v228 = vld [vmem:[#allocation8 + $0x38] sm:$0xff]
    %v229 = vld [vmem:[#allocation8 + $0x40] sm:$0xff]
    %v230 = vld [vmem:[#allocation8 + $0x48] sm:$0xff]
    %v231 = vld [vmem:[#allocation8 + $0x50] sm:$0xff]
    %v232 = vld [vmem:[#allocation8 + $0x58] sm:$0xff]
    %v233 = vld [vmem:[#allocation8 + $0x60] sm:$0xff]
    %v234 = vld [vmem:[#allocation8 + $0x68] sm:$0xff]
    %v235 = vld [vmem:[#allocation8 + $0x70] sm:$0xff]
    %v236 = vld [vmem:[#allocation8 + $0x78] sm:$0xff]
    %v237 = vld [vmem:[#allocation10] sm:$0x1]
    %v239 = vperm.slane %v237, 0
    %241 = vmatpush.msra.mxu0 %v236
    %242 = vmatpush.msra.mxu0 %v235
    %243 = vmatpush.msra.mxu0 %v234
    %244 = vmatpush.msra.mxu0 %v233
    %245 = vmatpush.msra.mxu0 %v232
    %246 = vmatpush.msra.mxu0 %v231
    %247 = vmatpush.msra.mxu0 %v230
    %248 = vmatpush.msra.mxu0 %v229
    %249 = vmatpush.msra.mxu0 %v228
    %250 = vmatpush.msra.mxu0 %v227
    %251 = vmatpush.msra.mxu0 %v226
    %252 = vmatpush.msra.mxu0 %v225
    %253 = vmatpush.msra.mxu0 %v224
    %254 = vmatpush.msra.mxu0 %v223
    %255 = vmatpush.msra.mxu0 %v222
    %256 = vmatpush.msra.mxu0 %v221
    %257 = vmatmul.f32.gmra.mxu0 %v220
    %v258 = vpop.f32.mrf.mxu0
    %v259 = vadd.f32 %v239, %v258
    %260 = vdwg.mxu0
    %v261 = vmax.f32 %v259, 0.0
    %v262 = vld [vmem:[#allocation11] sm:$0xff]
    %v263 = vld [vmem:[#allocation11 + $0x8] sm:$0xff]
    %v264 = vld [vmem:[#allocation11 + $0x10] sm:$0xff]
    %v265 = vld [vmem:[#allocation11 + $0x18] sm:$0xff]
    %v266 = vld [vmem:[#allocation11 + $0x20] sm:$0xff]
    %v267 = vld [vmem:[#allocation11 + $0x28] sm:$0xff]
    %v268 = vld [vmem:[#allocation11 + $0x30] sm:$0xff]
    %v269 = vld [vmem:[#allocation11 + $0x38] sm:$0xff]
    %v270 = vld [vmem:[#allocation11 + $0x40] sm:$0xff]
    %v271 = vld [vmem:[#allocation11 + $0x48] sm:$0xff]
    %v272 = vld [vmem:[#allocation11 + $0x50] sm:$0xff]
    %v273 = vld [vmem:[#allocation11 + $0x58] sm:$0xff]
    %v274 = vld [vmem:[#allocation11 + $0x60] sm:$0xff]
    %v275 = vld [vmem:[#allocation11 + $0x68] sm:$0xff]
    %v276 = vld [vmem:[#allocation11 + $0x70] sm:$0xff]
    %v277 = vld [vmem:[#allocation11 + $0x78] sm:$0xff]
    %v278 = vld [vmem:[%s6] sm:$0x1]
    %v280 = vperm.slane %v278, 0
    %282 = vmatpush.msra.mxu0 %v277
    %283 = vmatpush.msra.mxu0 %v276
    %284 = vmatpush.msra.mxu0 %v275
    %285 = vmatpush.msra.mxu0 %v274
    %286 = vmatpush.msra.mxu0 %v273
    %287 = vmatpush.msra.mxu0 %v272
    %288 = vmatpush.msra.mxu0 %v271
    %289 = vmatpush.msra.mxu0 %v270
    %290 = vmatpush.msra.mxu0 %v269
    %291 = vmatpush.msra.mxu0 %v268
    %292 = vmatpush.msra.mxu0 %v267
    %293 = vmatpush.msra.mxu0 %v266
    %294 = vmatpush.msra.mxu0 %v265
    %295 = vmatpush.msra.mxu0 %v264
    %296 = vmatpush.msra.mxu0 %v263
    %297 = vmatpush.msra.mxu0 %v262
    %298 = vmatmul.f32.gmra.mxu0 %v261
    %v299 = vpop.f32.mrf.mxu0
    %v300 = vadd.f32 %v280, %v299
    %301 = vdwg.mxu0
    %v302 = vmax.f32 %v300, 0.0
    %v303 = vld [vmem:[#allocation13] sm:$0xff]
    %v304 = vld [vmem:[#allocation13 + $0x8] sm:$0xff]
    %v305 = vld [vmem:[#allocation13 + $0x10] sm:$0xff]
    %v306 = vld [vmem:[#allocation13 + $0x18] sm:$0xff]
    %v307 = vld [vmem:[#allocation13 + $0x20] sm:$0xff]
    %v308 = vld [vmem:[#allocation13 + $0x28] sm:$0xff]
    %v309 = vld [vmem:[#allocation13 + $0x30] sm:$0xff]
    %v310 = vld [vmem:[#allocation13 + $0x38] sm:$0xff]
    %v311 = vld [vmem:[#allocation13 + $0x40] sm:$0xff]
    %v312 = vld [vmem:[#allocation13 + $0x48] sm:$0xff]
    %v313 = vld [vmem:[#allocation13 + $0x50] sm:$0xff]
    %v314 = vld [vmem:[#allocation13 + $0x58] sm:$0xff]
    %v315 = vld [vmem:[#allocation13 + $0x60] sm:$0xff]
    %v316 = vld [vmem:[#allocation13 + $0x68] sm:$0xff]
    %v317 = vld [vmem:[#allocation13 + $0x70] sm:$0xff]
    %v318 = vld [vmem:[#allocation13 + $0x78] sm:$0xff]
    %v319 = vld [vmem:[%s8] sm:$0x1]
    %v321 = vperm.slane %v319, 0
    %323 = vmatpush.msra.mxu0 %v318
    %324 = vmatpush.msra.mxu0 %v317
    %325 = vmatpush.msra.mxu0 %v316
    %326 = vmatpush.msra.mxu0 %v315
    %327 = vmatpush.msra.mxu0 %v314
    %328 = vmatpush.msra.mxu0 %v313
    %329 = vmatpush.msra.mxu0 %v312
    %330 = vmatpush.msra.mxu0 %v311
    %331 = vmatpush.msra.mxu0 %v310
    %332 = vmatpush.msra.mxu0 %v309
    %333 = vmatpush.msra.mxu0 %v308
    %334 = vmatpush.msra.mxu0 %v307
    %335 = vmatpush.msra.mxu0 %v306
    %336 = vmatpush.msra.mxu0 %v305
    %337 = vmatpush.msra.mxu0 %v304
    %338 = vmatpush.msra.mxu0 %v303
    %339 = vmatmul.f32.gmra.mxu0 %v302
    %v340 = vpop.f32.mrf.mxu0
    %v341 = vadd.f32 %v321, %v340
    %342 = vdwg.mxu0
    %v343 = vadd.f32 %v261, %v341
    %s344 = scalar_lea.vmem [#allocation11], 128
    %v345 = vld [vmem:[%s344] sm:$0xff]
    %v346 = vld [vmem:[%s344 + $0x8] sm:$0xff]
    %v347 = vld [vmem:[%s344 + $0x10] sm:$0xff]
    %v348 = vld [vmem:[%s344 + $0x18] sm:$0xff]
    %v349 = vld [vmem:[%s344 + $0x20] sm:$0xff]
    %v350 = vld [vmem:[%s344 + $0x28] sm:$0xff]
    %v351 = vld [vmem:[%s344 + $0x30] sm:$0xff]
    %v352 = vld [vmem:[%s344 + $0x38] sm:$0xff]
    %v353 = vld [vmem:[%s344 + $0x40] sm:$0xff]
    %v354 = vld [vmem:[%s344 + $0x48] sm:$0xff]
    %v355 = vld [vmem:[%s344 + $0x50] sm:$0xff]
    %v356 = vld [vmem:[%s344 + $0x58] sm:$0xff]
    %v357 = vld [vmem:[%s344 + $0x60] sm:$0xff]
    %v358 = vld [vmem:[%s344 + $0x68] sm:$0xff]
    %v359 = vld [vmem:[%s344 + $0x70] sm:$0xff]
    %v360 = vld [vmem:[%s344 + $0x78] sm:$0xff]
    %s361 = scalar_lea.vmem %s6, 1
    %v362 = vld [vmem:[%s361] sm:$0x1]
    %v364 = vperm.slane %v362, 0
    %366 = vmatpush.msra.mxu0 %v360
    %367 = vmatpush.msra.mxu0 %v359
    %368 = vmatpush.msra.mxu0 %v358
    %369 = vmatpush.msra.mxu0 %v357
    %370 = vmatpush.msra.mxu0 %v356
    %371 = vmatpush.msra.mxu0 %v355
    %372 = vmatpush.msra.mxu0 %v354
    %373 = vmatpush.msra.mxu0 %v353
    %374 = vmatpush.msra.mxu0 %v352
    %375 = vmatpush.msra.mxu0 %v351
    %376 = vmatpush.msra.mxu0 %v350
    %377 = vmatpush.msra.mxu0 %v349
    %378 = vmatpush.msra.mxu0 %v348
    %379 = vmatpush.msra.mxu0 %v347
    %380 = vmatpush.msra.mxu0 %v346
    %381 = vmatpush.msra.mxu0 %v345
    %382 = vmatmul.f32.gmra.mxu0 %v343
    %v383 = vpop.f32.mrf.mxu0
    %v384 = vadd.f32 %v364, %v383
    %385 = vdwg.mxu0
    %v386 = vmax.f32 %v384, 0.0
    %s387 = scalar_lea.vmem [#allocation13], 128
    %v388 = vld [vmem:[%s387] sm:$0xff]
    %v389 = vld [vmem:[%s387 + $0x8] sm:$0xff]
    %v390 = vld [vmem:[%s387 + $0x10] sm:$0xff]
    %v391 = vld [vmem:[%s387 + $0x18] sm:$0xff]
    %v392 = vld [vmem:[%s387 + $0x20] sm:$0xff]
    %v393 = vld [vmem:[%s387 + $0x28] sm:$0xff]
    %v394 = vld [vmem:[%s387 + $0x30] sm:$0xff]
    %v395 = vld [vmem:[%s387 + $0x38] sm:$0xff]
    %v396 = vld [vmem:[%s387 + $0x40] sm:$0xff]
    %v397 = vld [vmem:[%s387 + $0x48] sm:$0xff]
    %v398 = vld [vmem:[%s387 + $0x50] sm:$0xff]
    %v399 = vld [vmem:[%s387 + $0x58] sm:$0xff]
    %v400 = vld [vmem:[%s387 + $0x60] sm:$0xff]
    %v401 = vld [vmem:[%s387 + $0x68] sm:$0xff]
    %v402 = vld [vmem:[%s387 + $0x70] sm:$0xff]
    %v403 = vld [vmem:[%s387 + $0x78] sm:$0xff]
    %s404 = scalar_lea.vmem %s8, 1
    %v405 = vld [vmem:[%s404] sm:$0x1]
    %v407 = vperm.slane %v405, 0
    %409 = vmatpush.msra.mxu0 %v403
    %410 = vmatpush.msra.mxu0 %v402
    %411 = vmatpush.msra.mxu0 %v401
    %412 = vmatpush.msra.mxu0 %v400
    %413 = vmatpush.msra.mxu0 %v399
    %414 = vmatpush.msra.mxu0 %v398
    %415 = vmatpush.msra.mxu0 %v397
    %416 = vmatpush.msra.mxu0 %v396
    %417 = vmatpush.msra.mxu0 %v395
    %418 = vmatpush.msra.mxu0 %v394
    %419 = vmatpush.msra.mxu0 %v393
    %420 = vmatpush.msra.mxu0 %v392
    %421 = vmatpush.msra.mxu0 %v391
    %422 = vmatpush.msra.mxu0 %v390
    %423 = vmatpush.msra.mxu0 %v389
    %424 = vmatpush.msra.mxu0 %v388
    %425 = vmatmul.f32.gmra.mxu0 %v386
    %v426 = vpop.f32.mrf.mxu0
    %v427 = vadd.f32 %v407, %v426
    %428 = vdwg.mxu0
    %v429 = vadd.f32 %v343, %v427
    %s430 = scalar_lea.vmem [#allocation11], 256
    %v431 = vld [vmem:[%s430] sm:$0xff]
    %v432 = vld [vmem:[%s430 + $0x8] sm:$0xff]
    %v433 = vld [vmem:[%s430 + $0x10] sm:$0xff]
    %v434 = vld [vmem:[%s430 + $0x18] sm:$0xff]
    %v435 = vld [vmem:[%s430 + $0x20] sm:$0xff]
    %v436 = vld [vmem:[%s430 + $0x28] sm:$0xff]
    %v437 = vld [vmem:[%s430 + $0x30] sm:$0xff]
    %v438 = vld [vmem:[%s430 + $0x38] sm:$0xff]
    %v439 = vld [vmem:[%s430 + $0x40] sm:$0xff]
    %v440 = vld [vmem:[%s430 + $0x48] sm:$0xff]
    %v441 = vld [vmem:[%s430 + $0x50] sm:$0xff]
    %v442 = vld [vmem:[%s430 + $0x58] sm:$0xff]
    %v443 = vld [vmem:[%s430 + $0x60] sm:$0xff]
    %v444 = vld [vmem:[%s430 + $0x68] sm:$0xff]
    %v445 = vld [vmem:[%s430 + $0x70] sm:$0xff]
    %v446 = vld [vmem:[%s430 + $0x78] sm:$0xff]
    %s447 = scalar_lea.vmem %s6, 2
    %v448 = vld [vmem:[%s447] sm:$0x1]
    %v450 = vperm.slane %v448, 0
    %452 = vmatpush.msra.mxu0 %v446
    %453 = vmatpush.msra.mxu0 %v445
    %454 = vmatpush.msra.mxu0 %v444
    %455 = vmatpush.msra.mxu0 %v443
    %456 = vmatpush.msra.mxu0 %v442
    %457 = vmatpush.msra.mxu0 %v441
    %458 = vmatpush.msra.mxu0 %v440
    %459 = vmatpush.msra.mxu0 %v439
    %460 = vmatpush.msra.mxu0 %v438
    %461 = vmatpush.msra.mxu0 %v437
    %462 = vmatpush.msra.mxu0 %v436
    %463 = vmatpush.msra.mxu0 %v435
    %464 = vmatpush.msra.mxu0 %v434
    %465 = vmatpush.msra.mxu0 %v433
    %466 = vmatpush.msra.mxu0 %v432
    %467 = vmatpush.msra.mxu0 %v431
    %468 = vmatmul.f32.gmra.mxu0 %v429
    %v469 = vpop.f32.mrf.mxu0
    %v470 = vadd.f32 %v450, %v469
    %471 = vdwg.mxu0
    %v472 = vmax.f32 %v470, 0.0
    %s473 = scalar_lea.vmem [#allocation13], 256
    %v474 = vld [vmem:[%s473] sm:$0xff]
    %v475 = vld [vmem:[%s473 + $0x8] sm:$0xff]
    %v476 = vld [vmem:[%s473 + $0x10] sm:$0xff]
    %v477 = vld [vmem:[%s473 + $0x18] sm:$0xff]
    %v478 = vld [vmem:[%s473 + $0x20] sm:$0xff]
    %v479 = vld [vmem:[%s473 + $0x28] sm:$0xff]
    %v480 = vld [vmem:[%s473 + $0x30] sm:$0xff]
    %v481 = vld [vmem:[%s473 + $0x38] sm:$0xff]
    %v482 = vld [vmem:[%s473 + $0x40] sm:$0xff]
    %v483 = vld [vmem:[%s473 + $0x48] sm:$0xff]
    %v484 = vld [vmem:[%s473 + $0x50] sm:$0xff]
    %v485 = vld [vmem:[%s473 + $0x58] sm:$0xff]
    %v486 = vld [vmem:[%s473 + $0x60] sm:$0xff]
    %v487 = vld [vmem:[%s473 + $0x68] sm:$0xff]
    %v488 = vld [vmem:[%s473 + $0x70] sm:$0xff]
    %v489 = vld [vmem:[%s473 + $0x78] sm:$0xff]
    %s490 = scalar_lea.vmem %s8, 2
    %v491 = vld [vmem:[%s490] sm:$0x1]
    %v493 = vperm.slane %v491, 0
    %495 = vmatpush.msra.mxu0 %v489
    %496 = vmatpush.msra.mxu0 %v488
    %497 = vmatpush.msra.mxu0 %v487
    %498 = vmatpush.msra.mxu0 %v486
    %499 = vmatpush.msra.mxu0 %v485
    %500 = vmatpush.msra.mxu0 %v484
    %501 = vmatpush.msra.mxu0 %v483
    %502 = vmatpush.msra.mxu0 %v482
    %503 = vmatpush.msra.mxu0 %v481
    %504 = vmatpush.msra.mxu0 %v480
    %505 = vmatpush.msra.mxu0 %v479
    %506 = vmatpush.msra.mxu0 %v478
    %507 = vmatpush.msra.mxu0 %v477
    %508 = vmatpush.msra.mxu0 %v476
    %509 = vmatpush.msra.mxu0 %v475
    %510 = vmatpush.msra.mxu0 %v474
    %511 = vmatmul.f32.gmra.mxu0 %v472
    %v512 = vpop.f32.mrf.mxu0
    %v513 = vadd.f32 %v493, %v512
    %514 = vdwg.mxu0
    %v515 = vadd.f32 %v429, %v513
    %v516 = vld [vmem:[#allocation14] sm:$0xff]
    %v517 = vld [vmem:[#allocation14 + $0x8] sm:$0xff]
    %v518 = vld [vmem:[#allocation14 + $0x10] sm:$0xff]
    %v519 = vld [vmem:[#allocation14 + $0x18] sm:$0xff]
    %v520 = vld [vmem:[#allocation14 + $0x20] sm:$0xff]
    %v521 = vld [vmem:[#allocation14 + $0x28] sm:$0xff]
    %v522 = vld [vmem:[#allocation14 + $0x30] sm:$0xff]
    %v523 = vld [vmem:[#allocation14 + $0x38] sm:$0xff]
    %v524 = vld [vmem:[#allocation14 + $0x40] sm:$0xff]
    %v525 = vld [vmem:[#allocation14 + $0x48] sm:$0xff]
    %v526 = vld [vmem:[#allocation14 + $0x50] sm:$0xff]
    %v527 = vld [vmem:[#allocation14 + $0x58] sm:$0xff]
    %v528 = vld [vmem:[#allocation14 + $0x60] sm:$0xff]
    %v529 = vld [vmem:[#allocation14 + $0x68] sm:$0xff]
    %v530 = vld [vmem:[#allocation14 + $0x70] sm:$0xff]
    %v531 = vld [vmem:[#allocation14 + $0x78] sm:$0xff]
    %v532 = vld [vmem:[%s10] sm:$0x1]
    %v534 = vperm.slane %v532, 0
    %536 = vmatpush.msra.mxu0 %v531
    %537 = vmatpush.msra.mxu0 %v530
    %538 = vmatpush.msra.mxu0 %v529
    %539 = vmatpush.msra.mxu0 %v528
    %540 = vmatpush.msra.mxu0 %v527
    %541 = vmatpush.msra.mxu0 %v526
    %542 = vmatpush.msra.mxu0 %v525
    %543 = vmatpush.msra.mxu0 %v524
    %544 = vmatpush.msra.mxu0 %v523
    %545 = vmatpush.msra.mxu0 %v522
    %546 = vmatpush.msra.mxu0 %v521
    %547 = vmatpush.msra.mxu0 %v520
    %548 = vmatpush.msra.mxu0 %v519
    %549 = vmatpush.msra.mxu0 %v518
    %550 = vmatpush.msra.mxu0 %v517
    %551 = vmatpush.msra.mxu0 %v516
    %552 = vmatmul.f32.gmra.mxu0 %v515
    %v553 = vpop.f32.mrf.mxu0
    %v554 = vadd.f32 %v534, %v553
    %555 = vdwg.mxu0
    %v556 = vmax.f32 %v554, 0.0
    %v557 = vld [vmem:[#allocation16] sm:$0xff]
    %v558 = vld [vmem:[#allocation16 + $0x8] sm:$0xff]
    %v559 = vld [vmem:[#allocation16 + $0x10] sm:$0xff]
    %v560 = vld [vmem:[#allocation16 + $0x18] sm:$0xff]
    %v561 = vld [vmem:[#allocation16 + $0x20] sm:$0xff]
    %v562 = vld [vmem:[#allocation16 + $0x28] sm:$0xff]
    %v563 = vld [vmem:[#allocation16 + $0x30] sm:$0xff]
    %v564 = vld [vmem:[#allocation16 + $0x38] sm:$0xff]
    %v565 = vld [vmem:[#allocation16 + $0x40] sm:$0xff]
    %v566 = vld [vmem:[#allocation16 + $0x48] sm:$0xff]
    %v567 = vld [vmem:[#allocation16 + $0x50] sm:$0xff]
    %v568 = vld [vmem:[#allocation16 + $0x58] sm:$0xff]
    %v569 = vld [vmem:[#allocation16 + $0x60] sm:$0xff]
    %v570 = vld [vmem:[#allocation16 + $0x68] sm:$0xff]
    %v571 = vld [vmem:[#allocation16 + $0x70] sm:$0xff]
    %v572 = vld [vmem:[#allocation16 + $0x78] sm:$0xff]
    %v573 = vld [vmem:[%s12] sm:$0x1]
    %v575 = vperm.slane %v573, 0
    %577 = vmatpush.msra.mxu0 %v572
    %578 = vmatpush.msra.mxu0 %v571
    %579 = vmatpush.msra.mxu0 %v570
    %580 = vmatpush.msra.mxu0 %v569
    %581 = vmatpush.msra.mxu0 %v568
    %582 = vmatpush.msra.mxu0 %v567
    %583 = vmatpush.msra.mxu0 %v566
    %584 = vmatpush.msra.mxu0 %v565
    %585 = vmatpush.msra.mxu0 %v564
    %586 = vmatpush.msra.mxu0 %v563
    %587 = vmatpush.msra.mxu0 %v562
    %588 = vmatpush.msra.mxu0 %v561
    %589 = vmatpush.msra.mxu0 %v560
    %590 = vmatpush.msra.mxu0 %v559
    %591 = vmatpush.msra.mxu0 %v558
    %592 = vmatpush.msra.mxu0 %v557
    %593 = vmatmul.f32.gmra.mxu0 %v556
    %v594 = vpop.f32.mrf.mxu0
    %v595 = vadd.f32 %v575, %v594
    %596 = vdwg.mxu0
    %v597 = vtanh.pop %v595
    %598 = vst [vmem:[#allocation17] sm:$0xff] %v597
    // Predicated region
    $region90: #{tpu_custom_call.1} parent=1 // pred_check
      _
    $region91: #{tpu_custom_call.1} parent=1 // pred_check_branch
      %600 = sbr.rel (0) target = $region93
    $region92: #{tpu_custom_call.1} parent=1 // pred_region
      %602 = vsyncadd [#allocation4], 0
      %s604 = sshll.u32 [#allocation17], 4
      %s605 = int_to_ptr.vmem [resolvable:$true] %s604
      %s606 = sshll.u32 %s13, 4
      %s607 = int_to_ptr.hbm [resolvable:$true] %s606
      %609 = dma.vmem_to_hbm [thread:$0]  %s605, 128, %s607, [#allocation4]
    $region93: #{tpu_custom_call.1} parent=1 // pred_fallthru
      _
    // Predicated region
    $region94: #{tpu_custom_call.1} parent=1 // pred_check
      _
    $region95: #{tpu_custom_call.1} parent=1 // pred_check_branch
      %611 = sbr.rel (0) target = $region97
    $region96: #{tpu_custom_call.1} parent=1 // pred_region
      %613 = dma.done [#allocation4], 128
    $region97: #{tpu_custom_call.1} parent=1 // pred_fallthru
      _
    %614 = vsyncpa [#allocation3], 1
    %615 = vsyncpa [#allocation6], 1
    %616 = vsyncpa [#allocation9], 1
    %617 = vsyncpa [#allocation12], 1
    %618 = vsyncpa [#allocation15], 1
    %619 = vsyncpa [#allocation4], 1

</llo_original>
